<compile_context>
chip_gen: v5e
topology: v5e:2x2
jax: 0.10.0
libtpu: 0.0.40
codegen_flags: <defaults>
</compile_context>

<pallas_src>
import math

import jax
import jax.numpy as jnp
from jax.experimental import pallas as pl
from jax.experimental.pallas import tpu as pltpu


def _bst_kernel(x_ref, o_ref):
    # Straight-through binarization in the native dtype: +1 where x >= 0,
    # -1 otherwise.  Scalar splat constants, no full-tile materialization,
    # no f32 round trip for packed dtypes.
    dt = o_ref.dtype
    o_ref[...] = jnp.where(x_ref[...] >= 0, jnp.array(1, dt), jnp.array(-1, dt))


_LANES = 128
_SMALL_TENSOR_BYTES = 256 * 1024  # below this, fused XLA where() beats dispatch


def _block_bytes_and_vmem_limit():
    """Generation-conditional (per-TPU) block byte budget and VMEM limit."""
    try:
        kind = jax.devices()[0].device_kind.lower()
    except Exception:
        kind = ""
    if "v7" in kind:
        # 6 MiB blocks -> 24 MiB in flight with in/out double buffering; bump
        # the scoped limit for headroom (physical per-TC VMEM is 64 MiB).
        return 6 * 1024 * 1024, 40 * 1024 * 1024
    if "v6" in kind:
        # 16 MiB in flight, still under the 32 MiB scoped default.
        return 4 * 1024 * 1024, None
    # v5e / unknown: conservative — 8 MiB in flight, under the 16 MiB default.
    return 2 * 1024 * 1024, None


def _bst_slab(x2d: jax.Array, block_rows: int, vmem_limit) -> jax.Array:
    rows, width = x2d.shape
    grid = (pl.cdiv(rows, block_rows),)  # partial last block masked by Pallas
    return pl.pallas_call(
        _bst_kernel,
        out_shape=jax.ShapeDtypeStruct((rows, width), x2d.dtype),
        grid=grid,
        in_specs=[pl.BlockSpec((block_rows, width), lambda i: (i, 0))],
        out_specs=pl.BlockSpec((block_rows, width), lambda i: (i, 0)),
        compiler_params=pltpu.CompilerParams(
            dimension_semantics=("parallel",),
            vmem_limit_bytes=vmem_limit,
        ),
    )(x2d)


def binary_straight_through(
    x: jax.Array,
    *,
    target_block_bytes: int | None = None,
    small_tensor_threshold_bytes: int = _SMALL_TENSOR_BYTES,
) -> jax.Array:
    """Elementwise binarize to {-1, +1} (x >= 0 -> +1, x < 0 -> -1)."""
    orig_shape = x.shape
    dtype = x.dtype
    n = int(math.prod(orig_shape)) if orig_shape else 1
    itemsize = jnp.dtype(dtype).itemsize

    # ---- small-tensor fallback: skip pallas_call, let XLA fuse it ----------
    if n * itemsize <= small_tensor_threshold_bytes:
        return jnp.where(x >= 0, jnp.array(1, dtype), jnp.array(-1, dtype))

    block_bytes, vmem_limit = _block_bytes_and_vmem_limit()
    if target_block_bytes is not None:
        block_bytes = target_block_bytes

    flat = x.reshape(-1)

    # ---- split into a 128-multiple prefix (Pallas) + tiny tail (XLA) -------
    # No full-tensor jnp.pad / un-pad slice pass any more.
    n_main = (n // _LANES) * _LANES
    tail = n - n_main

    out_parts = []
    if n_main:
        main = flat[:n_main] if tail else flat  # fast path: no slice at all

        # Widest lane-dense width that divides the prefix.
        width = _LANES
        for cand in (4096, 2048, 1024, 512, 256):
            if n_main % cand == 0:
                width = cand
                break
        rows = n_main // width

        # Sublane-aligned row count per block, as big as the budget allows.
        sub_mult = max(8, 32 // itemsize)  # 8 (f32) / 16 (bf16) / 32 (int8)
        block_rows = (block_bytes // (width * itemsize)) // sub_mult * sub_mult
        block_rows = max(sub_mult, block_rows)
        block_rows = min(block_rows, rows)  # full-extent block is always legal

        out_main = _bst_slab(main.reshape(rows, width), block_rows, vmem_limit)
        out_parts.append(out_main.reshape(-1))

    if tail:
        t = flat[n_main:]
        out_parts.append(
            jnp.where(t >= 0, jnp.array(1, dtype), jnp.array(-1, dtype)))

    out_flat = out_parts[0] if len(out_parts) == 1 else jnp.concatenate(out_parts)
    return out_flat.reshape(orig_shape)


def _ref(x):
    return jnp.where(x >= 0, 1, -1).astype(x.dtype)


if __name__ == "__main__":
    k0, k1, k2, k3 = jax.random.split(jax.random.PRNGKey(0), 4)

    # 1) NCHW activation, forced through the Pallas path (threshold=0).
    x = jax.random.normal(k0, (2, 4, 16, 16), dtype=jnp.float32)
    y = jax.block_until_ready(
        binary_straight_through(x, small_tensor_threshold_bytes=0))
    assert y.shape == x.shape and y.dtype == x.dtype
    assert bool(jnp.all(y == _ref(x)))
    assert bool(jnp.all(jnp.abs(y) == 1.0))

    # 2) Ragged size: exercises the prefix-kernel + tail-select path.
    x2 = jax.random.normal(k1, (3, 5, 9), dtype=jnp.float32)
    y2 = jax.block_until_ready(
        binary_straight_through(x2, small_tensor_threshold_bytes=0))
    assert y2.shape == x2.shape and bool(jnp.all(y2 == _ref(x2)))

    # 3) Multi-step grid + partial last block (tiny block budget forces tiling).
    x3 = jax.random.normal(k2, (33, 128), dtype=jnp.float32)
    y3 = jax.block_until_ready(
        binary_straight_through(
            x3, target_block_bytes=4096, small_tensor_threshold_bytes=0))
    assert y3.shape == x3.shape and bool(jnp.all(y3 == _ref(x3)))

    # 4) bf16 input: exercises native-dtype compute / packed sublane multiple.
    x4 = jax.random.normal(k3, (4, 8, 32), dtype=jnp.bfloat16)
    y4 = jax.block_until_ready(
        binary_straight_through(x4, small_tensor_threshold_bytes=0))
    assert y4.dtype == jnp.bfloat16 and bool(jnp.all(y4 == _ref(x4)))

    # 5) Default small-tensor fallback path (no pallas_call).
    y5 = jax.block_until_ready(binary_straight_through(x))
    assert bool(jnp.all(y5 == _ref(x)))

    print("KERNEL_OK")
</pallas_src>

<mosaic_0001>
module attributes {stable_mosaic.version = 11 : i64} {
  func.func @_bst_kernel(%arg0: i32, %arg1: memref<1x2048xf32, #tpu.memory_space<vmem>>, %arg2: memref<1x2048xf32, #tpu.memory_space<vmem>>) attributes {dimension_semantics = [#tpu.dimension_semantics<parallel>], iteration_bounds = array<i64: 1>, scalar_prefetch = 0 : i64, scratch_operands = 0 : i64, tpu.core_type = #tpu.core_type<tc>, window_params = [{transform_indices = @transform_0, window_bounds = array<i64: 1, 2048>}, {transform_indices = @transform_1, window_bounds = array<i64: 1, 2048>}]} {
    %c0 = arith.constant 0 : index
    %c0_0 = arith.constant 0 : index
    %0 = vector.load %arg1[%c0, %c0_0] : memref<1x2048xf32, #tpu.memory_space<vmem>>, vector<1x2048xf32>
    %cst = arith.constant 0.000000e+00 : f32
    %1 = vector.broadcast %cst : f32 to vector<1x2048xf32>
    %2 = arith.cmpf oge, %0, %1 : vector<1x2048xf32>
    %cst_1 = arith.constant 1.000000e+00 : f32
    %cst_2 = arith.constant -1.000000e+00 : f32
    %3 = vector.broadcast %cst_1 : f32 to vector<1x2048xf32>
    %4 = vector.broadcast %cst_2 : f32 to vector<1x2048xf32>
    %5 = arith.select %2, %3, %4 : vector<1x2048xi1>, vector<1x2048xf32>
    %c0_3 = arith.constant 0 : index
    %c0_4 = arith.constant 0 : index
    %6 = vector.load %arg2[%c0_3, %c0_4] : memref<1x2048xf32, #tpu.memory_space<vmem>>, vector<1x2048xf32>
    tpu.vector_store %arg2[%c0_3, %c0_4], %5 {strides = array<i32>} : memref<1x2048xf32, #tpu.memory_space<vmem>>, vector<1x2048xf32>,
    return
  }
  func.func @transform_0(%arg0: i32) -> (i32, i32) {
    %c0_i32 = arith.constant 0 : i32
    %c0_i32_0 = arith.constant 0 : i32
    return %arg0, %c0_i32 : i32, i32
  }
  func.func @transform_1(%arg0: i32) -> (i32, i32) {
    %c0_i32 = arith.constant 0 : i32
    %c0_i32_0 = arith.constant 0 : i32
    return %arg0, %c0_i32 : i32, i32
  }
}

</mosaic_0001>

<llo_original>
// kernel: tpu_custom_call.1
$region0: #{tpu_custom_call.1}
  #allocation0 [shape = 'u32[]', space=smem, size = 0x4, offset = 0x4, fixed_abs, tag = 'smem constant byte address 0x4 - core index']
  #allocation1 [shape = 'u32[72,128]{1,0:T(1,128)}', space=vmem, size = 0x9000, scoped, tag = 'internal scratch']
  %s0 = inlined_call_operand.hbm [shape: f32[1,2048], index: 0, kind: input, shape index: {}]
  %s1 = inlined_call_operand.hbm [shape: f32[1,2048], index: 1, kind: output, shape index: {}]
  %s2 = sld [smem:[#allocation0]]
  $region18: #{tpu_custom_call.1} parent=0
    _
  %s4 = ssub.s32 1, %s2
  %s5 = scalar_select 0, %s4, %s2
  $region1: #{tpu_custom_call.1} parent=0
    #allocation2 [shape = 'u8[8192]{0}', space=vmem, size = 0x2000, scoped, tag = 'input window, operand 0, single buffered']
    #allocation3 [shape = 's32[1]{0}', space=sflag, size = 0x4, scoped, tag = 'scoped memory for tpu_custom_call.1']
    #allocation4 [shape = 's32[1]{0}', space=sflag, size = 0x4, scoped, tag = 'scoped memory for tpu_custom_call.1']
    #allocation5 [shape = 'u8[8192]{0}', space=vmem, size = 0x2000, scoped, tag = 'output window, operand 0, single buffered']
    %6 = vsyncpa [#allocation3], 0
    %7 = vsyncpa [#allocation4], 0
    // Predicated region
    $region2: #{tpu_custom_call.1} parent=1 // pred_check
      _
    $region3: #{tpu_custom_call.1} parent=1 // pred_check_branch
      %9 = sbr.rel (0) target = $region5
    $region4: #{tpu_custom_call.1} parent=1 // pred_region
      %11 = vsyncadd [#allocation3], 0
      %s13 = sshll.u32 %s0, 4
      %s14 = int_to_ptr.hbm [resolvable:$true] %s13
      %s15 = sshll.u32 [#allocation2], 4
      %s16 = int_to_ptr.vmem [resolvable:$true] %s15
      %18 = dma.hbm_to_vmem [thread:$0]  %s14, 256, %s16, [#allocation3]
    $region5: #{tpu_custom_call.1} parent=1 // pred_fallthru
      _
    // Predicated region
    $region6: #{tpu_custom_call.1} parent=1 // pred_check
      _
    $region7: #{tpu_custom_call.1} parent=1 // pred_check_branch
      %20 = sbr.rel (0) target = $region9
    $region8: #{tpu_custom_call.1} parent=1 // pred_region
      %22 = dma.done [#allocation3], 256
    $region9: #{tpu_custom_call.1} parent=1 // pred_fallthru
      _
    %v23 = vld [vmem:[#allocation2] sm:$0xff]
    %v24 = vld [vmem:[#allocation2 + $0x8] sm:$0xff]
    %vm25 = vcmp.ge.f32.partialorder %v23, 0.0
    %vm26 = vcmp.ge.f32.partialorder %v24, 0.0
    %v27 = vsel %vm25, 1.0, -1.0
    %v28 = vsel %vm26, 1.0, -1.0
    %29 = vst [vmem:[#allocation5] sm:$0xff] %v27
    %30 = vst [vmem:[#allocation5 + $0x8] sm:$0xff] %v28
    // Predicated region
    $region10: #{tpu_custom_call.1} parent=1 // pred_check
      _
    $region11: #{tpu_custom_call.1} parent=1 // pred_check_branch
      %32 = sbr.rel (0) target = $region13
    $region12: #{tpu_custom_call.1} parent=1 // pred_region
      %34 = vsyncadd [#allocation4], 0
      %s36 = sshll.u32 [#allocation5], 4
      %s37 = int_to_ptr.vmem [resolvable:$true] %s36
      %s38 = sshll.u32 %s1, 4
      %s39 = int_to_ptr.hbm [resolvable:$true] %s38
      %41 = dma.vmem_to_hbm [thread:$0]  %s37, 256, %s39, [#allocation4]
    $region13: #{tpu_custom_call.1} parent=1 // pred_fallthru
      _
    // Predicated region
    $region14: #{tpu_custom_call.1} parent=1 // pred_check
      _
    $region15: #{tpu_custom_call.1} parent=1 // pred_check_branch
      %43 = sbr.rel (0) target = $region17
    $region16: #{tpu_custom_call.1} parent=1 // pred_region
      %45 = dma.done [#allocation4], 256
    $region17: #{tpu_custom_call.1} parent=1 // pred_fallthru
      _
    %46 = vsyncpa [#allocation3], 1
    %47 = vsyncpa [#allocation4], 1

</llo_original>
